<compile_context>
chip_gen: v5e
topology: v5e:2x2
jax: 0.10.0
libtpu: 0.0.40
codegen_flags: <defaults>
</compile_context>

<pallas_src>
import functools

import jax
import jax.numpy as jnp
from jax.experimental import pallas as pl
from jax.experimental.pallas import tpu as pltpu


def _ipow(x, n):
    """x ** n for a positive Python int n via exponentiation-by-squaring (VALU only)."""
    result = None
    base = x
    while n > 0:
        if n & 1:
            result = base if result is None else result * base
        n >>= 1
        if n:
            base = base * base
    return result


def _abs_pow(x, p):
    """|x| ** p without EUP transcendentals for integer p (p == 2 -> one multiply)."""
    if float(p).is_integer() and p >= 1:
        ip = int(p)
        if ip % 2 == 0:
            return _ipow(x * x, ip // 2)   # even power: |x|^p == (x*x)^(p/2), no abs needed
        return _ipow(jnp.abs(x), ip)
    return jnp.abs(x) ** p                 # non-integer p: exp/log fallback


def _at_kernel(s_ref, t_ref, out_ref, *, p, eps):
    # (B_TILE, C, HW) tile of samples, computed in f32.
    s = s_ref[...].astype(jnp.float32)
    t = t_ref[...].astype(jnp.float32)

    # attention maps: sum_c |fm|^p  -> (B_TILE, HW)
    am_s = jnp.sum(_abs_pow(s, p), axis=1)
    am_t = jnp.sum(_abs_pow(t, p), axis=1)

    # Three scalars per sample; normalization + MSE done on scalars only.
    ss = jnp.sum(am_s * am_s, axis=1, keepdims=True)    # (B_TILE, 1)
    st = jnp.sum(am_t * am_t, axis=1, keepdims=True)
    sst = jnp.sum(am_s * am_t, axis=1, keepdims=True)

    ns = jnp.sqrt(ss) + eps
    nt = jnp.sqrt(st) + eps

    contrib = ss / (ns * ns) + st / (nt * nt) - 2.0 * sst / (ns * nt)

    # Independent per-block partial (keeps the batch grid axis "parallel").
    out_ref[...] = jnp.full(out_ref.shape, jnp.sum(contrib), dtype=out_ref.dtype)


def at_loss(fm_s, fm_t, p=2.0, eps=1e-6):
    """Attention-transfer loss between student/teacher feature maps (NCHW)."""
    assert fm_s.shape == fm_t.shape
    N, C, H, W = fm_s.shape
    HW = H * W
    s = fm_s.reshape(N, C, HW)
    t = fm_t.reshape(N, C, HW)

    # Batch tile: large enough to amortize per-step overhead / issue big DMAs,
    # small enough that 2 inputs x 2 pipeline buffers x block fit comfortably
    # in scoped VMEM on every generation (incl. v7x's 64 MiB physical VMEM).
    itemsize = jnp.dtype(fm_s.dtype).itemsize
    per_sample_bytes = C * HW * itemsize
    block_budget = 6 * 1024 * 1024                     # bytes per input block
    b_tile = int(max(1, min(N, block_budget // per_sample_bytes)))

    g = -(-N // b_tile)                                # ceil(N / b_tile)
    n_pad = g * b_tile
    if n_pad != N:
        # Zero-padded samples contribute exactly 0 (am == 0, norm -> eps).
        pad = n_pad - N
        s = jnp.concatenate([s, jnp.zeros((pad, C, HW), dtype=s.dtype)], axis=0)
        t = jnp.concatenate([t, jnp.zeros((pad, C, HW), dtype=t.dtype)], axis=0)

    kernel = functools.partial(_at_kernel, p=float(p), eps=float(eps))

    partials = pl.pallas_call(
        kernel,
        out_shape=jax.ShapeDtypeStruct((g, 8, 128), jnp.float32),
        grid_spec=pltpu.PrefetchScalarGridSpec(
            num_scalar_prefetch=0,
            grid=(g,),
            in_specs=[
                pl.BlockSpec((b_tile, C, HW), lambda i: (i, 0, 0)),
                pl.BlockSpec((b_tile, C, HW), lambda i: (i, 0, 0)),
            ],
            out_specs=pl.BlockSpec((1, 8, 128), lambda i: (i, 0, 0)),
        ),
        compiler_params=pltpu.CompilerParams(
            dimension_semantics=("parallel",),
        ),
    )(s, t)

    # mse_loss mean is over N*1*H*W elements (true N, not padded).
    return jnp.sum(partials[:, 0, 0]) / (N * HW)


def at_loss_ref(fm_s, fm_t, p=2.0, eps=1e-6):
    """Plain-JAX reference for sanity checking."""
    def attention_map(fm):
        am = jnp.sum(jnp.abs(fm) ** p, axis=1, keepdims=True)          # (N,1,H,W)
        norm = jnp.sqrt(jnp.sum(am * am, axis=(2, 3), keepdims=True))  # (N,1,1,1)
        return am / (norm + eps)

    a, b = attention_map(fm_s), attention_map(fm_t)
    return jnp.mean((a - b) ** 2)


if __name__ == "__main__":
    key = jax.random.PRNGKey(0)
    k1, k2 = jax.random.split(key)
    N, C, H, W = 2, 4, 16, 16
    fm_s = jax.random.normal(k1, (N, C, H, W), dtype=jnp.float32)
    fm_t = jax.random.normal(k2, (N, C, H, W), dtype=jnp.float32)

    loss = at_loss(fm_s, fm_t, p=2.0)
    jax.block_until_ready(loss)

    ref = at_loss_ref(fm_s, fm_t, p=2.0)
    assert jnp.allclose(loss, ref, rtol=1e-5, atol=1e-6), (loss, ref)

    print("KERNEL_OK")
</pallas_src>

<mosaic_0001>
module attributes {stable_mosaic.version = 11 : i64} {
  func.func @_at_kernel(%arg0: i32, %arg1: memref<2x4x256xf32, #tpu.memory_space<vmem>>, %arg2: memref<2x4x256xf32, #tpu.memory_space<vmem>>, %arg3: memref<1x8x128xf32, #tpu.memory_space<vmem>>) attributes {dimension_semantics = [#tpu.dimension_semantics<parallel>], iteration_bounds = array<i64: 1>, scalar_prefetch = 0 : i64, scratch_operands = 0 : i64, tpu.core_type = #tpu.core_type<tc>, window_params = [{transform_indices = @transform_0, window_bounds = array<i64: 2, 4, 256>}, {transform_indices = @transform_1, window_bounds = array<i64: 2, 4, 256>}, {transform_indices = @transform_2, window_bounds = array<i64: 1, 8, 128>}]} {
    %c0 = arith.constant 0 : index
    %c0_0 = arith.constant 0 : index
    %c0_1 = arith.constant 0 : index
    %0 = vector.load %arg1[%c0, %c0_0, %c0_1] : memref<2x4x256xf32, #tpu.memory_space<vmem>>, vector<2x4x256xf32>
    %c0_2 = arith.constant 0 : index
    %c0_3 = arith.constant 0 : index
    %c0_4 = arith.constant 0 : index
    %1 = vector.load %arg2[%c0_2, %c0_3, %c0_4] : memref<2x4x256xf32, #tpu.memory_space<vmem>>, vector<2x4x256xf32>
    %2 = arith.mulf %0, %0 : vector<2x4x256xf32>
    %cst = arith.constant dense<0.000000e+00> : vector<2x256xf32>
    %3 = vector.multi_reduction <add>, %2, %cst [1] : vector<2x4x256xf32> to vector<2x256xf32>
    %4 = arith.mulf %1, %1 : vector<2x4x256xf32>
    %cst_5 = arith.constant dense<0.000000e+00> : vector<2x256xf32>
    %5 = vector.multi_reduction <add>, %4, %cst_5 [1] : vector<2x4x256xf32> to vector<2x256xf32>
    %6 = arith.mulf %3, %3 : vector<2x256xf32>
    %cst_6 = arith.constant dense<0.000000e+00> : vector<2xf32>
    %7 = vector.multi_reduction <add>, %6, %cst_6 [1] : vector<2x256xf32> to vector<2xf32>
    %8 = vector.shape_cast %7 : vector<2xf32> to vector<2x1xf32>
    %9 = arith.mulf %5, %5 : vector<2x256xf32>
    %cst_7 = arith.constant dense<0.000000e+00> : vector<2xf32>
    %10 = vector.multi_reduction <add>, %9, %cst_7 [1] : vector<2x256xf32> to vector<2xf32>
    %11 = vector.shape_cast %10 : vector<2xf32> to vector<2x1xf32>
    %12 = arith.mulf %3, %5 : vector<2x256xf32>
    %cst_8 = arith.constant dense<0.000000e+00> : vector<2xf32>
    %13 = vector.multi_reduction <add>, %12, %cst_8 [1] : vector<2x256xf32> to vector<2xf32>
    %14 = vector.shape_cast %13 : vector<2xf32> to vector<2x1xf32>
    %15 = math.sqrt %8 : vector<2x1xf32>
    %cst_9 = arith.constant 9.99999997E-7 : f32
    %16 = vector.broadcast %cst_9 : f32 to vector<2x1xf32>
    %17 = arith.addf %15, %16 : vector<2x1xf32>
    %18 = math.sqrt %11 : vector<2x1xf32>
    %cst_10 = arith.constant 9.99999997E-7 : f32
    %19 = vector.broadcast %cst_10 : f32 to vector<2x1xf32>
    %20 = arith.addf %18, %19 : vector<2x1xf32>
    %21 = arith.mulf %17, %17 : vector<2x1xf32>
    %22 = arith.divf %8, %21 : vector<2x1xf32>
    %23 = arith.mulf %20, %20 : vector<2x1xf32>
    %24 = arith.divf %11, %23 : vector<2x1xf32>
    %25 = arith.addf %22, %24 : vector<2x1xf32>
    %cst_11 = arith.constant 2.000000e+00 : f32
    %26 = vector.broadcast %cst_11 : f32 to vector<2x1xf32>
    %27 = arith.mulf %26, %14 : vector<2x1xf32>
    %28 = arith.mulf %17, %20 : vector<2x1xf32>
    %29 = arith.divf %27, %28 : vector<2x1xf32>
    %30 = arith.subf %25, %29 : vector<2x1xf32>
    %31 = vector.shape_cast %30 : vector<2x1xf32> to vector<1x2x1xf32>
    %cst_12 = arith.constant dense<0.000000e+00> : vector<1xf32>
    %32 = vector.multi_reduction <add>, %31, %cst_12 [1, 2] : vector<1x2x1xf32> to vector<1xf32>
    %33 = vector.shape_cast %32 : vector<1xf32> to vector<1x1x1xf32>
    %34 = vector.extract %33[0, 0, 0] : f32 from vector<1x1x1xf32>
    %35 = vector.broadcast %34 : f32 to vector<1x8x128xf32>
    %c0_13 = arith.constant 0 : index
    %c0_14 = arith.constant 0 : index
    %c0_15 = arith.constant 0 : index
    %36 = vector.load %arg3[%c0_13, %c0_14, %c0_15] : memref<1x8x128xf32, #tpu.memory_space<vmem>>, vector<1x8x128xf32>
    tpu.vector_store %arg3[%c0_13, %c0_14, %c0_15], %35 {strides = array<i32>} : memref<1x8x128xf32, #tpu.memory_space<vmem>>, vector<1x8x128xf32>,
    return
  }
  func.func @transform_0(%arg0: i32) -> (i32, i32, i32) {
    %c0_i32 = arith.constant 0 : i32
    %c0_i32_0 = arith.constant 0 : i32
    %c0_i32_1 = arith.constant 0 : i32
    return %arg0, %c0_i32, %c0_i32_0 : i32, i32, i32
  }
  func.func @transform_1(%arg0: i32) -> (i32, i32, i32) {
    %c0_i32 = arith.constant 0 : i32
    %c0_i32_0 = arith.constant 0 : i32
    %c0_i32_1 = arith.constant 0 : i32
    return %arg0, %c0_i32, %c0_i32_0 : i32, i32, i32
  }
  func.func @transform_2(%arg0: i32) -> (i32, i32, i32) {
    %c0_i32 = arith.constant 0 : i32
    %c0_i32_0 = arith.constant 0 : i32
    %c0_i32_1 = arith.constant 0 : i32
    return %arg0, %c0_i32, %c0_i32_0 : i32, i32, i32
  }
}

</mosaic_0001>

<llo_original>
// kernel: tpu_custom_call.1
$region0: #{tpu_custom_call.1}
  #allocation0 [shape = 'u32[]', space=smem, size = 0x4, offset = 0x4, fixed_abs, tag = 'smem constant byte address 0x4 - core index']
  #allocation1 [shape = 'u32[72,128]{1,0:T(1,128)}', space=vmem, size = 0x9000, scoped, tag = 'internal scratch']
  %s0 = inlined_call_operand.hbm [shape: f32[2,4,256], index: 0, kind: input, shape index: {}]
  %s1 = inlined_call_operand.hbm [shape: f32[2,4,256], index: 1, kind: input, shape index: {}]
  %s2 = inlined_call_operand.hbm [shape: f32[1,8,128], index: 2, kind: output, shape index: {}]
  %s3 = sld [smem:[#allocation0]]
  $region26: #{tpu_custom_call.1} parent=0
    _
  %s5 = ssub.s32 1, %s3
  %s6 = scalar_select 0, %s5, %s3
  $region1: #{tpu_custom_call.1} parent=0
    #allocation2 [shape = 'u8[8192]{0}', space=vmem, size = 0x2000, scoped, tag = 'input window, operand 0, single buffered']
    #allocation3 [shape = 's32[1]{0}', space=sflag, size = 0x4, scoped, tag = 'scoped memory for tpu_custom_call.1']
    #allocation4 [shape = 's32[1]{0}', space=sflag, size = 0x4, scoped, tag = 'scoped memory for tpu_custom_call.1']
    #allocation5 [shape = 'u8[8192]{0}', space=vmem, size = 0x2000, scoped, tag = 'input window, operand 1, single buffered']
    #allocation6 [shape = 's32[1]{0}', space=sflag, size = 0x4, scoped, tag = 'scoped memory for tpu_custom_call.1']
    #allocation7 [shape = 'u8[4096]{0}', space=vmem, size = 0x1000, scoped, tag = 'output window, operand 0, single buffered']
    %7 = vsyncpa [#allocation3], 0
    %8 = vsyncpa [#allocation6], 0
    %9 = vsyncpa [#allocation4], 0
    // Predicated region
    $region2: #{tpu_custom_call.1} parent=1 // pred_check
      _
    $region3: #{tpu_custom_call.1} parent=1 // pred_check_branch
      %11 = sbr.rel (0) target = $region5
    $region4: #{tpu_custom_call.1} parent=1 // pred_region
      %13 = vsyncadd [#allocation3], 0
      %s14 = sshll.u32 %s0, 4
      %s15 = int_to_ptr.hbm [resolvable:$true] %s14
      %s16 = sshll.u32 [#allocation2], 4
      %s17 = int_to_ptr.vmem [resolvable:$true] %s16
      %22 = dma.hbm_to_vmem [thread:$0]  %s15, 256, %s17, [#allocation3], 128, 128, 8
    $region5: #{tpu_custom_call.1} parent=1 // pred_fallthru
      _
    // Predicated region
    $region6: #{tpu_custom_call.1} parent=1 // pred_check
      _
    $region7: #{tpu_custom_call.1} parent=1 // pred_check_branch
      %24 = sbr.rel (0) target = $region9
    $region8: #{tpu_custom_call.1} parent=1 // pred_region
      %26 = vsyncadd [#allocation6], 0
      %s27 = sshll.u32 %s1, 4
      %s28 = int_to_ptr.hbm [resolvable:$true] %s27
      %s29 = sshll.u32 [#allocation5], 4
      %s30 = int_to_ptr.vmem [resolvable:$true] %s29
      %35 = dma.hbm_to_vmem [thread:$0]  %s28, 256, %s30, [#allocation6], 128, 128, 8
    $region9: #{tpu_custom_call.1} parent=1 // pred_fallthru
      _
    // Predicated region
    $region10: #{tpu_custom_call.1} parent=1 // pred_check
      _
    $region11: #{tpu_custom_call.1} parent=1 // pred_check_branch
      %37 = sbr.rel (0) target = $region13
    $region12: #{tpu_custom_call.1} parent=1 // pred_region
      %39 = dma.done [#allocation3], 256
    $region13: #{tpu_custom_call.1} parent=1 // pred_fallthru
      _
    // Predicated region
    $region14: #{tpu_custom_call.1} parent=1 // pred_check
      _
    $region15: #{tpu_custom_call.1} parent=1 // pred_check_branch
      %41 = sbr.rel (0) target = $region17
    $region16: #{tpu_custom_call.1} parent=1 // pred_region
      %43 = dma.done [#allocation6], 256
    $region17: #{tpu_custom_call.1} parent=1 // pred_fallthru
      _
    %v44 = vld [vmem:[#allocation2] sm:$0xff]
    %v45 = vld [vmem:[#allocation2 + $0x8] sm:$0xff]
    %v46 = vld [vmem:[#allocation5] sm:$0xff]
    %v47 = vld [vmem:[#allocation5 + $0x8] sm:$0xff]
    %v48 = vmul.f32 %v44, %v44
    %v49 = vmul.f32 %v45, %v45
    %52 = vst [vmem:[#allocation1] ss:$2 sm:$0xff] %v48
    %v53 = vld.sshfl [vmem:[#allocation1] sm:$0xff pattern:$0x75316420]
    %v54 = vld.sshfl [vmem:[#allocation1 + $0x8] sm:$0xff pattern:$0x75316420]
    %s55 = scalar_lea.vmem [#allocation1], 16
    %56 = vst [vmem:[%s55] ss:$2 sm:$0xff] %v49
    %v57 = vld.sshfl [vmem:[#allocation1 + $0x10] sm:$0xff pattern:$0x75316420]
    %v58 = vld.sshfl [vmem:[#allocation1 + $0x18] sm:$0xff pattern:$0x75316420]
    %vm63 = vcmask 1043456
    %v64 = vsel %vm63, %v53, 0.0
    %v65 = vrot.slane %v64, 4
    %v66 = vadd.f32 %v64, %v65
    %v67 = vrot.slane %v66, 2
    %v68 = vadd.f32 %v66, %v67
    %v69 = vrot.slane %v68, 1
    %v70 = vadd.f32 %v68, %v69
    %v71 = vsel %vm63, %v54, 0.0
    %v72 = vrot.slane %v71, 4
    %v73 = vadd.f32 %v71, %v72
    %v74 = vrot.slane %v73, 2
    %v75 = vadd.f32 %v73, %v74
    %v76 = vrot.slane %v75, 1
    %v77 = vadd.f32 %v75, %v76
    %v78 = vsel %vm63, %v57, 0.0
    %v79 = vrot.slane %v78, 4
    %v80 = vadd.f32 %v78, %v79
    %v81 = vrot.slane %v80, 2
    %v82 = vadd.f32 %v80, %v81
    %v83 = vrot.slane %v82, 1
    %v84 = vadd.f32 %v82, %v83
    %v85 = vsel %vm63, %v58, 0.0
    %v86 = vrot.slane %v85, 4
    %v87 = vadd.f32 %v85, %v86
    %v88 = vrot.slane %v87, 2
    %v89 = vadd.f32 %v87, %v88
    %v90 = vrot.slane %v89, 1
    %v91 = vadd.f32 %v89, %v90
    %v92 = vmul.f32 %v46, %v46
    %v93 = vmul.f32 %v47, %v47
    %96 = vst [vmem:[#allocation1] ss:$2 sm:$0xff] %v92
    %v97 = vld.sshfl [vmem:[#allocation1] sm:$0xff pattern:$0x75316420]
    %v98 = vld.sshfl [vmem:[#allocation1 + $0x8] sm:$0xff pattern:$0x75316420]
    %s99 = scalar_lea.vmem [#allocation1], 16
    %100 = vst [vmem:[%s99] ss:$2 sm:$0xff] %v93
    %v101 = vld.sshfl [vmem:[#allocation1 + $0x10] sm:$0xff pattern:$0x75316420]
    %v102 = vld.sshfl [vmem:[#allocation1 + $0x18] sm:$0xff pattern:$0x75316420]
    %v107 = vsel %vm63, %v97, 0.0
    %v108 = vrot.slane %v107, 4
    %v109 = vadd.f32 %v107, %v108
    %v110 = vrot.slane %v109, 2
    %v111 = vadd.f32 %v109, %v110
    %v112 = vrot.slane %v111, 1
    %v113 = vadd.f32 %v111, %v112
    %v114 = vsel %vm63, %v98, 0.0
    %v115 = vrot.slane %v114, 4
    %v116 = vadd.f32 %v114, %v115
    %v117 = vrot.slane %v116, 2
    %v118 = vadd.f32 %v116, %v117
    %v119 = vrot.slane %v118, 1
    %v120 = vadd.f32 %v118, %v119
    %v121 = vsel %vm63, %v101, 0.0
    %v122 = vrot.slane %v121, 4
    %v123 = vadd.f32 %v121, %v122
    %v124 = vrot.slane %v123, 2
    %v125 = vadd.f32 %v123, %v124
    %v126 = vrot.slane %v125, 1
    %v127 = vadd.f32 %v125, %v126
    %v128 = vsel %vm63, %v102, 0.0
    %v129 = vrot.slane %v128, 4
    %v130 = vadd.f32 %v128, %v129
    %v131 = vrot.slane %v130, 2
    %v132 = vadd.f32 %v130, %v131
    %v133 = vrot.slane %v132, 1
    %v134 = vadd.f32 %v132, %v133
    %v135 = vmul.f32 %v70, %v70
    %v136 = vmul.f32 %v77, %v77
    %v137 = vmul.f32 %v84, %v84
    %v138 = vmul.f32 %v91, %v91
    %vm143 = vcmask 1041409
    %v144 = vsel %vm143, %v137, %v135
    %v145 = vsel %vm143, %v138, %v136
    %vm148 = vcmask 1041408
    %v149 = vsel %vm148, %v144, 0.0
    %v150 = vsel %vm148, %v145, 0.0
    %v151 = vadd.f32 %v149, %v150
    %152 = vadd.xlane.f32.xlu0 %v151
    %v153 = vpop.xlane.xlu0 %152
    %v154 = vmul.f32 %v113, %v113
    %v155 = vmul.f32 %v120, %v120
    %v156 = vmul.f32 %v127, %v127
    %v157 = vmul.f32 %v134, %v134
    %v162 = vsel %vm143, %v156, %v154
    %v163 = vsel %vm143, %v157, %v155
    %v166 = vsel %vm148, %v162, 0.0
    %v167 = vsel %vm148, %v163, 0.0
    %v168 = vadd.f32 %v166, %v167
    %169 = vadd.xlane.f32.xlu0 %v168
    %v170 = vpop.xlane.xlu0 %169
    %v171 = vmul.f32 %v70, %v113
    %v172 = vmul.f32 %v77, %v120
    %v173 = vmul.f32 %v84, %v127
    %v174 = vmul.f32 %v91, %v134
    %v179 = vsel %vm143, %v173, %v171
    %v180 = vsel %vm143, %v174, %v172
    %v183 = vsel %vm148, %v179, 0.0
    %v184 = vsel %vm148, %v180, 0.0
    %v185 = vadd.f32 %v183, %v184
    %186 = vadd.xlane.f32.xlu0 %v185
    %v187 = vpop.xlane.xlu0 %186
    %v188 = vrsqrt.pop %v153
    %v189 = vmul.f32 %v188, %v153
    %v190 = vmul.f32 %v189, %v188
    %v191 = vmul.f32 0.5, %v190
    %v192 = vsub.f32 1.5, %v191
    %v193 = vmul.f32 %v188, %v192
    %v194 = vmul.f32 %v153, %v193
    %vm195 = vcmp.eq.f32.partialorder %v153, inf
    %v196 = vsel %vm195, %v153, %v194
    %vm197 = vcmp.eq.f32.partialorder %v153, 0.0
    %v198 = vand.u32 %v153, 2147483648
    %v199 = vsel %vm197, %v198, %v196
    %v200 = vadd.f32 %v199, 1e-06
    %v201 = vrsqrt.pop %v170
    %v202 = vmul.f32 %v201, %v170
    %v203 = vmul.f32 %v202, %v201
    %v204 = vmul.f32 0.5, %v203
    %v205 = vsub.f32 1.5, %v204
    %v206 = vmul.f32 %v201, %v205
    %v207 = vmul.f32 %v170, %v206
    %vm208 = vcmp.eq.f32.partialorder %v170, inf
    %v209 = vsel %vm208, %v170, %v207
    %vm210 = vcmp.eq.f32.partialorder %v170, 0.0
    %v211 = vand.u32 %v170, 2147483648
    %v212 = vsel %vm210, %v211, %v209
    %v213 = vadd.f32 %v212, 1e-06
    %v214 = vmul.f32 %v200, %v200
    %v215 = vrcp.pop %v214
    %v216 = vmul.f32 %v214, %v215
    %v217 = vsub.f32 1.0, %v216
    %v218 = vmul.f32 %v215, %v217
    %v219 = vadd.f32 %v215, %v218
    %vm220 = vweird.f32 %v214
    %vm221 = vweird.f32 %v215
    %vm222 = vmor %vm220, %vm221
    %v223 = vsel %vm222, %v215, %v219
    %v224 = vand.u32 2147483647, %v214
    %vm225 = vcmp.eq.f32.partialorder %v224, 8.507059e+37
    %v226 = vand.u32 %v214, 2147483648
    %v227 = vor.u32 1.1754944e-38, %v226
    %v228 = vsel %vm225, %v227, %v223
    %v229 = vmul.f32 %v153, %v228
    %v230 = vmul.f32 %v213, %v213
    %v231 = vrcp.pop %v230
    %v232 = vmul.f32 %v230, %v231
    %v233 = vsub.f32 1.0, %v232
    %v234 = vmul.f32 %v231, %v233
    %v235 = vadd.f32 %v231, %v234
    %vm236 = vweird.f32 %v230
    %vm237 = vweird.f32 %v231
    %vm238 = vmor %vm236, %vm237
    %v239 = vsel %vm238, %v231, %v235
    %v240 = vand.u32 2147483647, %v230
    %vm241 = vcmp.eq.f32.partialorder %v240, 8.507059e+37
    %v242 = vand.u32 %v230, 2147483648
    %v243 = vor.u32 1.1754944e-38, %v242
    %v244 = vsel %vm241, %v243, %v239
    %v245 = vmul.f32 %v170, %v244
    %v246 = vadd.f32 %v229, %v245
    %v247 = vmul.f32 %v187, 2.0
    %v248 = vmul.f32 %v200, %v213
    %v249 = vrcp.pop %v248
    %v250 = vmul.f32 %v248, %v249
    %v251 = vsub.f32 1.0, %v250
    %v252 = vmul.f32 %v249, %v251
    %v253 = vadd.f32 %v249, %v252
    %vm254 = vweird.f32 %v248
    %vm255 = vweird.f32 %v249
    %vm256 = vmor %vm254, %vm255
    %v257 = vsel %vm256, %v249, %v253
    %v258 = vand.u32 2147483647, %v248
    %vm259 = vcmp.eq.f32.partialorder %v258, 8.507059e+37
    %v260 = vand.u32 %v248, 2147483648
    %v261 = vor.u32 1.1754944e-38, %v260
    %v262 = vsel %vm259, %v261, %v257
    %v263 = vmul.f32 %v247, %v262
    %v264 = vsub.f32 %v246, %v263
    %vm265 = vcmask 1024
    %v266 = vsel %vm265, %v264, 0.0
    %267 = vadd.xlane.f32.xlu0 %v266
    %v268 = vpop.xlane.xlu0 %267
    %v269 = vrot.slane %v268, 4
    %v270 = vadd.f32 %v268, %v269
    %v271 = vrot.slane %v270, 2
    %v272 = vadd.f32 %v270, %v271
    %v273 = vrot.slane %v272, 1
    %v274 = vadd.f32 %v272, %v273
    %s275 = vtos %v274
    %v276 = vstv %s275
    %277 = vst [vmem:[#allocation7] sm:$0xff] %v276
    // Predicated region
    $region18: #{tpu_custom_call.1} parent=1 // pred_check
      _
    $region19: #{tpu_custom_call.1} parent=1 // pred_check_branch
      %279 = sbr.rel (0) target = $region21
    $region20: #{tpu_custom_call.1} parent=1 // pred_region
      %281 = vsyncadd [#allocation4], 0
      %s283 = sshll.u32 [#allocation7], 4
      %s284 = int_to_ptr.vmem [resolvable:$true] %s283
      %s285 = sshll.u32 %s2, 4
      %s286 = int_to_ptr.hbm [resolvable:$true] %s285
      %288 = dma.vmem_to_hbm [thread:$0]  %s284, 128, %s286, [#allocation4]
    $region21: #{tpu_custom_call.1} parent=1 // pred_fallthru
      _
    // Predicated region
    $region22: #{tpu_custom_call.1} parent=1 // pred_check
      _
    $region23: #{tpu_custom_call.1} parent=1 // pred_check_branch
      %290 = sbr.rel (0) target = $region25
    $region24: #{tpu_custom_call.1} parent=1 // pred_region
      %292 = dma.done [#allocation4], 128
    $region25: #{tpu_custom_call.1} parent=1 // pred_fallthru
      _
    %293 = vsyncpa [#allocation3], 1
    %294 = vsyncpa [#allocation6], 1
    %295 = vsyncpa [#allocation4], 1

</llo_original>
